<compile_context>
chip_gen: v6e
topology: v6e:2x2x1
jax: 0.10.0
libtpu: 0.0.40
codegen_flags: <defaults>
</compile_context>

<pallas_src>
import jax
import jax.numpy as jnp
from jax.experimental import pallas as pl
from jax.experimental.pallas import tpu as pltpu

_LANE = 128  # lane width: last dim of every block must be a multiple of this (or full)


def _round_up(n, m):
    return ((n + m - 1) // m) * m


def _cdiv(a, b):
    return (a + b - 1) // b


def _mlp_kernel(x_ref, w1_ref, b1_ref, w2_ref, b2_ref, o_ref, acc_ref):
    # x_ref : (tile_b, d_in_p)      w1_ref: (d_in_p, tile_h)   b1_ref: (1, tile_h)
    # w2_ref: (tile_h, d_out_p)     b2_ref: (1, d_out_p)
    # o_ref : (tile_b, d_out_p)     acc_ref: (tile_b, d_out_p) f32 scratch
    k = pl.program_id(1)

    @pl.when(k == 0)
    def _():
        acc_ref[...] = jnp.zeros_like(acc_ref)

    h = jnp.dot(x_ref[...], w1_ref[...], preferred_element_type=jnp.float32)
    h = jnp.maximum(h + b1_ref[...], 0.0)          # Linear -> ReLU, in f32
    # Dropout(p=0.0) / eval mode -> identity.
    acc_ref[...] += jnp.dot(h.astype(w2_ref.dtype), w2_ref[...],
                            preferred_element_type=jnp.float32)

    @pl.when(k == pl.num_programs(1) - 1)
    def _():
        o_ref[...] = (acc_ref[...] + b2_ref[...]).astype(o_ref.dtype)


def _vmem_budget():
    """Generation-aware VMEM numbers: (physical, compiler limit, chooser budget)."""
    try:
        cap = int(pltpu.get_tpu_info().vmem_capacity_bytes)
    except Exception:
        cap = 64 * 1024 * 1024                      # conservative (v7x-sized) fallback
    limit = (cap * 3) // 4                          # ~96 MiB on v5e/v6e, ~48 MiB on v7x
    budget = max(limit - 8 * 1024 * 1024, limit // 2)   # headroom for compiler scratch
    return cap, limit, budget


def _choose_tiling(B, d_in_p, d_hid_p, d_out_p, itemsize, budget, vmem_cap, sublane):
    """Returns (tile_b, n_b, tile_h, n_h, B_pad, d_hid_pad)."""
    B8 = _round_up(max(B, sublane), sublane)
    small_vmem = vmem_cap <= 64 * 1024 * 1024       # v7x-like: 64 MiB per TC, 2 TCs
    row_cap = 1024 if small_vmem else 4096          # bigger batch tiles on v5e/v6e

    b2_bytes = d_out_p * itemsize

    # ---- hidden (K) tiling: prefer fully resident, single-buffered weights. ----
    full_w_bytes = (d_in_p * d_hid_p + d_hid_p * d_out_p + d_hid_p) * itemsize + b2_bytes
    if full_w_bytes <= budget // 2:
        tile_h, n_h = d_hid_p, 1
        weight_vmem = full_w_bytes                   # Buffered(1): no double-buffer
    else:
        # K-tiled fallback: W1/b1/W2 blocks change with k -> double-buffered.
        per_h_col = 2 * (d_in_p + d_out_p + 1) * itemsize
        tile_h = max(_LANE, ((budget // 2) // per_h_col) // _LANE * _LANE)
        n_h = _cdiv(d_hid_p, tile_h)
        tile_h = _round_up(_cdiv(d_hid_p, n_h), _LANE)
        weight_vmem = per_h_col * tile_h + b2_bytes
    d_hid_pad = tile_h * n_h

    # ---- batch (M) tiling: biggest sublane-aligned tile that fits what's left. ----
    per_row = (2 * d_in_p * itemsize    # double-buffered x tile
               + 2 * d_out_p * itemsize  # double-buffered output tile
               + 4 * d_out_p             # f32 accumulator scratch
               + 4 * tile_h)             # f32 hidden intermediate
    avail = max(budget - weight_vmem, per_row * sublane)
    tile_limit = max(sublane, min(row_cap, (avail // per_row) // sublane * sublane))

    n_b = _cdiv(B8, tile_limit)
    if small_vmem:                        # v7x: >= 2 and even step count so both TCs work
        n_b = max(n_b, 2)
        n_b += n_b % 2
    tile_b = _round_up(_cdiv(B8, n_b), sublane)      # pad waste < sublane rows per step
    return tile_b, n_b, tile_h, n_h, tile_b * n_b, d_hid_pad


def _maybe_pad(a, shape):
    """Zero-pad to `shape`, skipping the copy when already the right shape."""
    if tuple(a.shape) == tuple(shape):
        return a
    return jnp.pad(a, [(0, t - s) for s, t in zip(a.shape, shape)])


def _spec(shape, index_map, resident):
    if resident:   # constant index_map -> never re-fetched -> single buffer
        return pl.BlockSpec(shape, index_map, pipeline_mode=pl.Buffered(1))
    return pl.BlockSpec(shape, index_map)


def prompt_readout_net(x, w1, b1, w2, b2, *, dropout=0.0, compute_dtype=None,
                       force_pallas=False, min_pallas_rows=256):
    """Forward pass of PromptReadoutNet.

    x  : (B, input_dim)
    w1 : (input_dim, hidden_dim)   b1 : (hidden_dim,)
    w2 : (hidden_dim, out_dim)     b2 : (out_dim,)
    returns (B, out_dim)
    """
    assert dropout == 0.0, "only p=0 / eval-mode dropout is supported"
    # TODO(synk): training-mode dropout (p>0) needs pltpu.prng_seed/prng_random_bits.

    B, d_in = x.shape
    d_hid = w1.shape[1]
    d_out = w2.shape[1]
    out_dtype = jnp.result_type(x.dtype, w1.dtype, w2.dtype)

    # Tiny problems: per-call + per-grid-step overhead dominates; let XLA fuse it.
    if not force_pallas and B < min_pallas_rows:
        h = jnp.maximum(x @ w1 + b1, 0.0)
        return (h @ w2 + b2).astype(out_dtype)

    cdt = jnp.dtype(compute_dtype) if compute_dtype is not None else jnp.dtype(
        jnp.result_type(x.dtype, w1.dtype))
    itemsize = cdt.itemsize
    sublane = {4: 8, 2: 16, 1: 32}.get(itemsize, 8)

    # Lane-pad feature dims (lane-dense loads/stores, full MXU tiles).
    d_in_p = _round_up(d_in, _LANE)
    d_out_p = _round_up(d_out, _LANE)
    d_hid_p0 = _round_up(d_hid, _LANE)

    vmem_cap, vmem_limit, budget = _vmem_budget()
    tile_b, n_b, tile_h, n_h, B_pad, d_hid_p = _choose_tiling(
        B, d_in_p, d_hid_p0, d_out_p, itemsize, budget, vmem_cap, sublane)

    # Zero-padding is mathematically inert (padded x cols x zero W1 rows; padded hidden
    # cols: zero bias -> ReLU(0)=0 -> zero W2 rows; padded out cols / batch rows sliced off).
    x_p = _maybe_pad(x, (B_pad, d_in_p))
    w1_p = _maybe_pad(w1, (d_in_p, d_hid_p))
    b1_p = _maybe_pad(b1.reshape(1, -1), (1, d_hid_p))
    w2_p = _maybe_pad(w2, (d_hid_p, d_out_p))
    b2_p = _maybe_pad(b2.reshape(1, -1), (1, d_out_p))

    if compute_dtype is not None:   # bf16 MXU path (v6e/v7x); f32 accumulation in-kernel
        x_p = x_p.astype(cdt)
        w1_p = w1_p.astype(cdt)
        w2_p = w2_p.astype(cdt)

    resident = (n_h == 1)
    grid = (n_b, n_h)
    flops = 2 * B_pad * (d_in_p * d_hid_p + d_hid_p * d_out_p)
    bytes_accessed = (B_pad * d_in_p * itemsize
                      + B_pad * d_out_p * jnp.dtype(out_dtype).itemsize
                      + (d_in_p * d_hid_p + d_hid_p * d_out_p) * itemsize
                      + (d_hid_p + d_out_p) * 4)

    out = pl.pallas_call(
        _mlp_kernel,
        out_shape=jax.ShapeDtypeStruct((B_pad, d_out_p), out_dtype),
        grid_spec=pltpu.PrefetchScalarGridSpec(
            num_scalar_prefetch=0,
            grid=grid,
            in_specs=[
                pl.BlockSpec((tile_b, d_in_p), lambda i, k: (i, 0)),       # x tile
                _spec((d_in_p, tile_h), lambda i, k: (0, k), resident),    # W1
                _spec((1, tile_h), lambda i, k: (0, k), resident),         # b1
                _spec((tile_h, d_out_p), lambda i, k: (k, 0), resident),   # W2
                _spec((1, d_out_p), lambda i, k: (0, 0), True),            # b2 (constant)
            ],
            out_specs=pl.BlockSpec((tile_b, d_out_p), lambda i, k: (i, 0)),
            scratch_shapes=[pltpu.VMEM((tile_b, d_out_p), jnp.float32)],
        ),
        compiler_params=pltpu.CompilerParams(
            dimension_semantics=("parallel", "arbitrary"),
            vmem_limit_bytes=int(vmem_limit),
        ),
        cost_estimate=pl.CostEstimate(flops=int(flops), transcendentals=0,
                                      bytes_accessed=int(bytes_accessed)),
    )(x_p, w1_p, b1_p, w2_p, b2_p)

    return out[:B, :d_out]


if __name__ == "__main__":
    # Small shapes consistent with the module's forward: x is [batch, input_dim].
    B, INPUT_DIM, HIDDEN_DIM, OUT_DIM = 64, 32, 64, 16

    key = jax.random.PRNGKey(0)
    kx, kw1, kb1, kw2, kb2 = jax.random.split(key, 5)

    x = jax.random.normal(kx, (B, INPUT_DIM), dtype=jnp.float32)
    # Synthetic params (shapes match nn.Linear weights, stored transposed: [in, out]).
    w1 = jax.random.normal(kw1, (INPUT_DIM, HIDDEN_DIM), dtype=jnp.float32) * 0.1
    b1 = jax.random.normal(kb1, (HIDDEN_DIM,), dtype=jnp.float32) * 0.1
    w2 = jax.random.normal(kw2, (HIDDEN_DIM, OUT_DIM), dtype=jnp.float32) * 0.1
    b2 = jax.random.normal(kb2, (OUT_DIM,), dtype=jnp.float32) * 0.1

    # Pure-JAX reference (Linear -> ReLU -> Dropout(0) -> Linear).
    ref = jnp.maximum(x @ w1 + b1, 0.0) @ w2 + b2

    # Pallas path (force: tiny batches would otherwise auto-route to XLA).
    out = jax.block_until_ready(
        prompt_readout_net(x, w1, b1, w2, b2, force_pallas=True))
    assert out.shape == (B, OUT_DIM)
    assert jnp.allclose(out, ref, atol=1e-5, rtol=1e-5)

    # Auto-dispatch (XLA) path at this tiny size must agree too.
    out_xla = jax.block_until_ready(prompt_readout_net(x, w1, b1, w2, b2))
    assert jnp.allclose(out_xla, ref, atol=1e-5, rtol=1e-5)

    # Larger batch exercises the multi-tile grid; also check the bf16 MXU path
    # (loose tolerance: bf16 inputs, f32 accumulation, f32 output).
    xb = jax.random.normal(kx, (512, INPUT_DIM), dtype=jnp.float32)
    refb = jnp.maximum(xb @ w1 + b1, 0.0) @ w2 + b2
    outb = jax.block_until_ready(prompt_readout_net(xb, w1, b1, w2, b2))
    assert outb.shape == (512, OUT_DIM)
    assert jnp.allclose(outb, refb, atol=1e-4, rtol=1e-4)

    outbf = jax.block_until_ready(
        prompt_readout_net(xb, w1, b1, w2, b2,
                           compute_dtype=jnp.bfloat16, force_pallas=True))
    assert outbf.dtype == refb.dtype
    assert jnp.allclose(outbf, refb, atol=5e-2, rtol=5e-2)

    print("KERNEL_OK")
</pallas_src>

<mosaic_0001>
module attributes {stable_mosaic.version = 11 : i64} {
  func.func @_mlp_kernel(%arg0: i32, %arg1: i32, %arg2: memref<32x128xf32, #tpu.memory_space<vmem>>, %arg3: memref<128x128xf32, #tpu.memory_space<vmem>>, %arg4: memref<1x128xf32, #tpu.memory_space<vmem>>, %arg5: memref<128x128xf32, #tpu.memory_space<vmem>>, %arg6: memref<1x128xf32, #tpu.memory_space<vmem>>, %arg7: memref<32x128xf32, #tpu.memory_space<vmem>>, %arg8: memref<32x128xf32, #tpu.memory_space<vmem>>) attributes {dimension_semantics = [#tpu.dimension_semantics<parallel>, #tpu.dimension_semantics<arbitrary>], iteration_bounds = array<i64: 2, 1>, scalar_prefetch = 0 : i64, scratch_operands = 1 : i64, tpu.core_type = #tpu.core_type<tc>, window_params = [{transform_indices = @transform_0, window_bounds = array<i64: 32, 128>}, {pipeline_mode = #tpu.pipeline_mode<synchronous>, transform_indices = @transform_1, window_bounds = array<i64: 128, 128>}, {pipeline_mode = #tpu.pipeline_mode<synchronous>, transform_indices = @transform_2, window_bounds = array<i64: 1, 128>}, {pipeline_mode = #tpu.pipeline_mode<synchronous>, transform_indices = @transform_3, window_bounds = array<i64: 128, 128>}, {pipeline_mode = #tpu.pipeline_mode<synchronous>, transform_indices = @transform_4, window_bounds = array<i64: 1, 128>}, {transform_indices = @transform_5, window_bounds = array<i64: 32, 128>}]} {
    %c0_i32 = arith.constant 0 : i32
    %0 = arith.cmpi eq, %arg1, %c0_i32 : i32
    %1 = arith.extui %0 : i1 to i32
    %c0_i32_0 = arith.constant 0 : i32
    %2 = arith.cmpi ne, %1, %c0_i32_0 : i32
    scf.if %2 {
      %cst_16 = arith.constant 0.000000e+00 : f32
      %19 = vector.broadcast %cst_16 : f32 to vector<32x128xf32>
      %c0_17 = arith.constant 0 : index
      %c0_18 = arith.constant 0 : index
      %20 = vector.load %arg8[%c0_17, %c0_18] : memref<32x128xf32, #tpu.memory_space<vmem>>, vector<32x128xf32>
      tpu.vector_store %arg8[%c0_17, %c0_18], %19 {strides = array<i32>} : memref<32x128xf32, #tpu.memory_space<vmem>>, vector<32x128xf32>,
    } else {
    }
    %c0 = arith.constant 0 : index
    %c0_1 = arith.constant 0 : index
    %3 = vector.load %arg2[%c0, %c0_1] : memref<32x128xf32, #tpu.memory_space<vmem>>, vector<32x128xf32>
    %c0_2 = arith.constant 0 : index
    %c0_3 = arith.constant 0 : index
    %4 = vector.load %arg3[%c0_2, %c0_3] : memref<128x128xf32, #tpu.memory_space<vmem>>, vector<128x128xf32>
    %cst = arith.constant dense<0.000000e+00> : vector<32x128xf32>
    %5 = tpu.matmul %3, %4, %cst {dimension_numbers = #tpu.dot_dimension_numbers<[1], [0], [0], [1], [0, 0, 1, 1], [], []>} : vector<32x128xf32>, vector<128x128xf32>, vector<32x128xf32> -> vector<32x128xf32>
    %c0_4 = arith.constant 0 : index
    %c0_5 = arith.constant 0 : index
    %6 = vector.load %arg4[%c0_4, %c0_5] : memref<1x128xf32, #tpu.memory_space<vmem>>, vector<1x128xf32>
    %7 = vector.broadcast %6 : vector<1x128xf32> to vector<32x128xf32>
    %8 = arith.addf %5, %7 : vector<32x128xf32>
    %cst_6 = arith.constant 0.000000e+00 : f32
    %9 = vector.broadcast %cst_6 : f32 to vector<32x128xf32>
    %10 = arith.maximumf %8, %9 : vector<32x128xf32>
    %c0_7 = arith.constant 0 : index
    %c0_8 = arith.constant 0 : index
    %11 = vector.load %arg8[%c0_7, %c0_8] : memref<32x128xf32, #tpu.memory_space<vmem>>, vector<32x128xf32>
    %c0_9 = arith.constant 0 : index
    %c0_10 = arith.constant 0 : index
    %12 = vector.load %arg5[%c0_9, %c0_10] : memref<128x128xf32, #tpu.memory_space<vmem>>, vector<128x128xf32>
    %cst_11 = arith.constant dense<0.000000e+00> : vector<32x128xf32>
    %13 = tpu.matmul %10, %12, %cst_11 {dimension_numbers = #tpu.dot_dimension_numbers<[1], [0], [0], [1], [0, 0, 1, 1], [], []>} : vector<32x128xf32>, vector<128x128xf32>, vector<32x128xf32> -> vector<32x128xf32>
    %14 = arith.addf %11, %13 : vector<32x128xf32>
    %c0_12 = arith.constant 0 : index
    %c0_13 = arith.constant 0 : index
    %15 = vector.load %arg8[%c0_12, %c0_13] : memref<32x128xf32, #tpu.memory_space<vmem>>, vector<32x128xf32>
    tpu.vector_store %arg8[%c0_12, %c0_13], %14 {strides = array<i32>} : memref<32x128xf32, #tpu.memory_space<vmem>>, vector<32x128xf32>,
    %c0_i32_14 = arith.constant 0 : i32
    %16 = arith.cmpi eq, %arg1, %c0_i32_14 : i32
    %17 = arith.extui %16 : i1 to i32
    %c0_i32_15 = arith.constant 0 : i32
    %18 = arith.cmpi ne, %17, %c0_i32_15 : i32
    scf.if %18 {
      %c0_16 = arith.constant 0 : index
      %c0_17 = arith.constant 0 : index
      %19 = vector.load %arg8[%c0_16, %c0_17] : memref<32x128xf32, #tpu.memory_space<vmem>>, vector<32x128xf32>
      %c0_18 = arith.constant 0 : index
      %c0_19 = arith.constant 0 : index
      %20 = vector.load %arg6[%c0_18, %c0_19] : memref<1x128xf32, #tpu.memory_space<vmem>>, vector<1x128xf32>
      %21 = vector.broadcast %20 : vector<1x128xf32> to vector<32x128xf32>
      %22 = arith.addf %19, %21 : vector<32x128xf32>
      %c0_20 = arith.constant 0 : index
      %c0_21 = arith.constant 0 : index
      %23 = vector.load %arg7[%c0_20, %c0_21] : memref<32x128xf32, #tpu.memory_space<vmem>>, vector<32x128xf32>
      tpu.vector_store %arg7[%c0_20, %c0_21], %22 {strides = array<i32>} : memref<32x128xf32, #tpu.memory_space<vmem>>, vector<32x128xf32>,
    } else {
    }
    return
  }
  func.func @transform_0(%arg0: i32, %arg1: i32) -> (i32, i32) {
    %c0_i32 = arith.constant 0 : i32
    %c0_i32_0 = arith.constant 0 : i32
    return %arg0, %c0_i32 : i32, i32
  }
  func.func @transform_1(%arg0: i32, %arg1: i32) -> (i32, i32) {
    %c0_i32 = arith.constant 0 : i32
    %c0_i32_0 = arith.constant 0 : i32
    return %c0_i32, %arg1 : i32, i32
  }
  func.func @transform_2(%arg0: i32, %arg1: i32) -> (i32, i32) {
    %c0_i32 = arith.constant 0 : i32
    %c0_i32_0 = arith.constant 0 : i32
    return %c0_i32, %arg1 : i32, i32
  }
  func.func @transform_3(%arg0: i32, %arg1: i32) -> (i32, i32) {
    %c0_i32 = arith.constant 0 : i32
    %c0_i32_0 = arith.constant 0 : i32
    return %arg1, %c0_i32 : i32, i32
  }
  func.func @transform_4(%arg0: i32, %arg1: i32) -> (i32, i32) {
    %c0_i32 = arith.constant 0 : i32
    %c0_i32_0 = arith.constant 0 : i32
    %c0_i32_1 = arith.constant 0 : i32
    return %c0_i32, %c0_i32_0 : i32, i32
  }
  func.func @transform_5(%arg0: i32, %arg1: i32) -> (i32, i32) {
    %c0_i32 = arith.constant 0 : i32
    %c0_i32_0 = arith.constant 0 : i32
    return %arg0, %c0_i32 : i32, i32
  }
}

</mosaic_0001>

<llo_original>
// kernel: tpu_custom_call.1
$region0: #{tpu_custom_call.1}
  #allocation0 [shape = 'u32[]', space=smem, size = 0x4, offset = 0x4, fixed_abs, tag = 'smem constant byte address 0x4 - core index']
  #allocation1 [shape = 'u32[144,128]{1,0:T(1,128)}', space=vmem, size = 0x12000, scoped, tag = 'internal scratch']
  #allocation2 [shape = 'f32[32,128]{1,0:T(8,128)}', space=vmem, size = 0x4000, scoped, tag = 'scratch operand']
  %s0 = inlined_call_operand.hbm [shape: f32[64,128], index: 0, kind: input, shape index: {}]
  %s1 = inlined_call_operand.hbm [shape: f32[128,128], index: 1, kind: input, shape index: {}]
  %s2 = inlined_call_operand.vmem [shape: f32[1,128], index: 2, kind: input, shape index: {}]
  %s3 = inlined_call_operand.hbm [shape: f32[128,128], index: 3, kind: input, shape index: {}]
  %s4 = inlined_call_operand.vmem [shape: f32[1,128], index: 4, kind: input, shape index: {}]
  %s5 = inlined_call_operand.hbm [shape: f32[64,128], index: 5, kind: output, shape index: {}]
  %s6 = sld [smem:[#allocation0]]
  $region73: #{tpu_custom_call.1} parent=0
    _
  %s8 = ssub.s32 1, %s6
  %s9 = scalar_select 0, %s8, %s6
  $region1: #{tpu_custom_call.1} parent=0
    #allocation3 [shape = 'u8[32768]{0}', space=vmem, size = 0x8000, scoped, tag = 'input window, operand 0']
    #allocation4 [shape = 's32[2]{0}', space=sflag, size = 0x8, scoped, tag = 'scoped memory for tpu_custom_call.1']
    #allocation5 [shape = 's32[2]{0}', space=sflag, size = 0x8, scoped, tag = 'scoped memory for tpu_custom_call.1']
    #allocation6 [shape = 'u8[65536]{0}', space=vmem, size = 0x10000, scoped, tag = 'input window, operand 1, single buffered']
    #allocation7 [shape = 's32[1]{0}', space=sflag, size = 0x4, scoped, tag = 'scoped memory for tpu_custom_call.1']
    #allocation8 [shape = 'u8[65536]{0}', space=vmem, size = 0x10000, scoped, tag = 'input window, operand 3, single buffered']
    #allocation9 [shape = 'u8[32768]{0}', space=vmem, size = 0x8000, scoped, tag = 'output window, operand 0']
    %10 = vsyncpa [#allocation4], 0
    %s11 = scalar_lea.sflag [#allocation4], 1
    %12 = vsyncpa %s11, 0
    %13 = vsyncpa [#allocation7], 0
    %14 = vsyncpa [#allocation5], 0
    %s15 = scalar_lea.sflag [#allocation5], 1
    %16 = vsyncpa %s15, 0
    loop: start=0, step=1, limit=4
    $region2: #{tpu_custom_call.1} parent=1 // loop_pre_header
      _
    $region3: #{tpu_custom_call.1} parent=1 // loop_header
      %s18 = sphi 0, %s22
      %p19 = scmp.ge.s32.totalorder %s18, 4
      %s25 = sphi 0, %s37
      %s26 = sphi 0, %s33
      %s27 = sphi 0, %s25
      %s28 = sphi 0, %s26
      %s29 = sphi 0, %s27
      %s30 = sphi 0, %s28
      %s40 = sphi 0, %s42
      %s43 = sphi 0, %s40
      %s44 = sphi 0, %s43
      %s60 = sphi 0, %s44
      %s66 = sphi 0, %s68
      %s69 = sphi 0, %s66
      %s70 = sphi 0, %s69
      %s86 = sphi 0, %s70
      %s92 = sphi 0, %s94
      %s95 = sphi 0, %s92
      %s96 = sphi 0, %s95
      %s112 = sphi 0, %s96
      %s118 = sphi 0, %s120
      %s121 = sphi 0, %s118
      %s122 = sphi 0, %s121
      %s138 = sphi 0, %s122
      %s142 = sphi 0, %s142
      %s144 = sphi 0, %s142
      %s145 = sphi 0, %s144
      %s159 = sphi 0, %s145
      %s165 = sphi 0, %s167
      %s168 = sphi 0, %s165
      %s169 = sphi 0, %s168
      %s185 = sphi 0, %s169
    $region4: #{tpu_custom_call.1} parent=1 // loop_header_branch
      %21 = sbr.rel (%p19) target = $region8
    $region5: #{tpu_custom_call.1} parent=1 // loop_body
      %s23 = ssub.s32 %s18, 1
      %s24 = ssub.s32 %s18, 2
      %s31 = sadd.s32 1, %s26
      %p32 = scmp.ge.s32.totalorder %s31, 1
      %s33 = scalar_select %p32, 0, %s31
      %s34 = sadd.s32 1, %s25
      %s35 = scalar_select %p32, %s34, %s25
      %p36 = scmp.ge.s32.totalorder %s35, 2
      %s37 = scalar_select %p36, 0, %s35
      %s38 = ssub.s32 %s25, %s37
      %p39 = scmp.eq.s32.totalorder %s38, 0
      %s41 = sadd.s32 %s40, 1
      %s42 = scalar_select %p39, %s40, %s41
      %p45 = pneg %p39
      %p46 = scmp.eq.s32.totalorder %s18, 1
      %p47 = por %p45, %p46
      %p48 = scmp.ne.s32.totalorder %s40, %s43
      %p49 = scmp.eq.s32.totalorder %s18, 0
      %p50 = por %p48, %p49
      %p51 = scmp.ne.s32.totalorder %s40, %s43
      %p52 = scmp.eq.s32.totalorder %s23, 1
      %p53 = por %p51, %p52
      %p54 = scmp.ne.s32.totalorder %s43, %s44
      %p55 = scmp.eq.s32.totalorder %s23, 0
      %p56 = por %p54, %p55
      %p57 = scmp.ne.s32.totalorder %s43, %s44
      %p58 = scmp.eq.s32.totalorder %s24, 1
      %p59 = por %p57, %p58
      %p61 = scmp.ne.s32.totalorder %s44, %s60
      %p62 = scmp.eq.s32.totalorder %s24, 0
      %p63 = por %p61, %p62
      %s64 = ssub.s32 %s26, %s33
      %p65 = scmp.eq.s32.totalorder %s64, 0
      %s67 = sadd.s32 %s66, 1
      %s68 = scalar_select %p65, %s66, %s67
      %p71 = pneg %p65
      %p72 = scmp.eq.s32.totalorder %s18, 1
      %p73 = por %p71, %p72
      %p74 = scmp.ne.s32.totalorder %s66, %s69
      %p75 = scmp.eq.s32.totalorder %s18, 0
      %p76 = por %p74, %p75
      %p77 = scmp.ne.s32.totalorder %s66, %s69
      %p78 = scmp.eq.s32.totalorder %s23, 1
      %p79 = por %p77, %p78
      %p80 = scmp.ne.s32.totalorder %s69, %s70
      %p81 = scmp.eq.s32.totalorder %s23, 0
      %p82 = por %p80, %p81
      %p83 = scmp.ne.s32.totalorder %s69, %s70
      %p84 = scmp.eq.s32.totalorder %s24, 1
      %p85 = por %p83, %p84
      %p87 = scmp.ne.s32.totalorder %s70, %s86
      %p88 = scmp.eq.s32.totalorder %s24, 0
      %p89 = por %p87, %p88
      %s90 = ssub.s32 %s26, %s33
      %p91 = scmp.eq.s32.totalorder %s90, 0
      %s93 = sadd.s32 %s92, 1
      %s94 = scalar_select %p91, %s92, %s93
      %p97 = pneg %p91
      %p98 = scmp.eq.s32.totalorder %s18, 1
      %p99 = por %p97, %p98
      %p100 = scmp.ne.s32.totalorder %s92, %s95
      %p101 = scmp.eq.s32.totalorder %s18, 0
      %p102 = por %p100, %p101
      %p103 = scmp.ne.s32.totalorder %s92, %s95
      %p104 = scmp.eq.s32.totalorder %s23, 1
      %p105 = por %p103, %p104
      %p106 = scmp.ne.s32.totalorder %s95, %s96
      %p107 = scmp.eq.s32.totalorder %s23, 0
      %p108 = por %p106, %p107
      %p109 = scmp.ne.s32.totalorder %s95, %s96
      %p110 = scmp.eq.s32.totalorder %s24, 1
      %p111 = por %p109, %p110
      %p113 = scmp.ne.s32.totalorder %s96, %s112
      %p114 = scmp.eq.s32.totalorder %s24, 0
      %p115 = por %p113, %p114
      %s116 = ssub.s32 %s26, %s33
      %p117 = scmp.eq.s32.totalorder %s116, 0
      %s119 = sadd.s32 %s118, 1
      %s120 = scalar_select %p117, %s118, %s119
      %p123 = pneg %p117
      %p124 = scmp.eq.s32.totalorder %s18, 1
      %p125 = por %p123, %p124
      %p126 = scmp.ne.s32.totalorder %s118, %s121
      %p127 = scmp.eq.s32.totalorder %s18, 0
      %p128 = por %p126, %p127
      %p129 = scmp.ne.s32.totalorder %s118, %s121
      %p130 = scmp.eq.s32.totalorder %s23, 1
      %p131 = por %p129, %p130
      %p132 = scmp.ne.s32.totalorder %s121, %s122
      %p133 = scmp.eq.s32.totalorder %s23, 0
      %p134 = por %p132, %p133
      %p135 = scmp.ne.s32.totalorder %s121, %s122
      %p136 = scmp.eq.s32.totalorder %s24, 1
      %p137 = por %p135, %p136
      %p139 = scmp.ne.s32.totalorder %s122, %s138
      %p140 = scmp.eq.s32.totalorder %s24, 0
      %p141 = por %p139, %p140
      %s143 = sadd.s32 %s142, 1
      %p146 = scmp.eq.s32.totalorder %s18, 1
      %p147 = scmp.ne.s32.totalorder %s142, %s144
      %p148 = scmp.eq.s32.totalorder %s18, 0
      %p149 = por %p147, %p148
      %p150 = scmp.ne.s32.totalorder %s142, %s144
      %p151 = scmp.eq.s32.totalorder %s23, 1
      %p152 = por %p150, %p151
      %p153 = scmp.ne.s32.totalorder %s144, %s145
      %p154 = scmp.eq.s32.totalorder %s23, 0
      %p155 = por %p153, %p154
      %p156 = scmp.ne.s32.totalorder %s144, %s145
      %p157 = scmp.eq.s32.totalorder %s24, 1
      %p158 = por %p156, %p157
      %p160 = scmp.ne.s32.totalorder %s145, %s159
      %p161 = scmp.eq.s32.totalorder %s24, 0
      %p162 = por %p160, %p161
      %s163 = ssub.s32 %s25, %s37
      %p164 = scmp.eq.s32.totalorder %s163, 0
      %s166 = sadd.s32 %s165, 1
      %s167 = scalar_select %p164, %s165, %s166
      %p170 = pneg %p164
      %p171 = scmp.eq.s32.totalorder %s18, 1
      %p172 = por %p170, %p171
      %p173 = scmp.ne.s32.totalorder %s165, %s168
      %p174 = scmp.eq.s32.totalorder %s18, 0
      %p175 = por %p173, %p174
      %p176 = scmp.ne.s32.totalorder %s165, %s168
      %p177 = scmp.eq.s32.totalorder %s23, 1
      %p178 = por %p176, %p177
      %p179 = scmp.ne.s32.totalorder %s168, %s169
      %p180 = scmp.eq.s32.totalorder %s23, 0
      %p181 = por %p179, %p180
      %p182 = scmp.ne.s32.totalorder %s168, %s169
      %p183 = scmp.eq.s32.totalorder %s24, 1
      %p184 = por %p182, %p183
      %p186 = scmp.ne.s32.totalorder %s169, %s185
      %p187 = scmp.eq.s32.totalorder %s24, 0
      %p188 = por %p186, %p187
      %p189 = scmp.le.s32.totalorder 1, %s18
      %p190 = scmp.lt.s32.totalorder %s18, 3
      %p191 = pnand %p189, %p190
      %p192 = pneg %p191
      // Predicated region
      $region9: #{tpu_custom_call.1} parent=5 // pred_check
        _
      $region10: #{tpu_custom_call.1} parent=5 // pred_check_branch
        %194 = sbr.rel (%p191) target = $region12
      $region11: #{tpu_custom_call.1} parent=5 // pred_region
        %s195 = ssub.s32 %s18, 1
        // Predicated region
        $region13: #{tpu_custom_call.1} parent=11 // pred_check
          %p196 = pneg %p82
        $region14: #{tpu_custom_call.1} parent=11 // pred_check_branch
          %198 = sbr.rel (%p196) target = $region16
        $region15: #{tpu_custom_call.1} parent=11 // pred_region
          %s200 = ssub.s32 2048, 2048
          %201 = vsyncadd [#allocation7], %s200
          %s202 = smul.addr %s28, 128
          %s203 = scalar_lea.hbm %s1, %s202
          %s204 = sshll.u32 [#allocation6], 4
          %s205 = int_to_ptr.vmem [resolvable:$true] %s204
          %210 = dma.hbm_to_vmem [thread:$0]  %s203, 2048, %s205, [#allocation7], 128, 128, 8
        $region16: #{tpu_custom_call.1} parent=11 // pred_fallthru
          _
        // Predicated region
        $region17: #{tpu_custom_call.1} parent=11 // pred_check
          %p211 = pneg %p108
        $region18: #{tpu_custom_call.1} parent=11 // pred_check_branch
          %213 = sbr.rel (%p211) target = $region20
        $region19: #{tpu_custom_call.1} parent=11 // pred_region
          %p214 = scmp.lt.s32.totalorder %s28, 0
          %s215 = scalar_select %p214, %s28, 0
          %s216 = scalar_lea.vmem %s2, %s215
        $region20: #{tpu_custom_call.1} parent=11 // pred_fallthru
          _
        // Predicated region
        $region21: #{tpu_custom_call.1} parent=11 // pred_check
          %p217 = pneg %p134
        $region22: #{tpu_custom_call.1} parent=11 // pred_check_branch
          %219 = sbr.rel (%p217) target = $region24
        $region23: #{tpu_custom_call.1} parent=11 // pred_region
          %s220 = smul.u32 16, %s28
          %s222 = ssub.s32 2048, 2048
          %223 = vsyncadd [#allocation7], %s222
          %s224 = smul.addr %s220, 128
          %s225 = scalar_lea.hbm %s3, %s224
          %s226 = sshll.u32 [#allocation8], 4
          %s227 = int_to_ptr.vmem [resolvable:$true] %s226
          %232 = dma.hbm_to_vmem [thread:$0]  %s225, 2048, %s227, [#allocation7], 128, 128, 8
        $region24: #{tpu_custom_call.1} parent=11 // pred_fallthru
          _
        // Predicated region
        $region25: #{tpu_custom_call.1} parent=11 // pred_check
          %p233 = pneg %p155
        $region26: #{tpu_custom_call.1} parent=11 // pred_check_branch
          %235 = sbr.rel (%p233) target = $region28
        $region27: #{tpu_custom_call.1} parent=11 // pred_region
          _
        $region28: #{tpu_custom_call.1} parent=11 // pred_fallthru
          _
      $region12: #{tpu_custom_call.1} parent=5 // pred_fallthru
        _
      %p236 = scmp.lt.s32.totalorder %s18, 2
      // Predicated region
      $region29: #{tpu_custom_call.1} parent=5 // pred_check
        %p237 = pneg %p236
      $region30: #{tpu_custom_call.1} parent=5 // pred_check_branch
        %239 = sbr.rel (%p237) target = $region32
      $region31: #{tpu_custom_call.1} parent=5 // pred_region
        // Predicated region
        $region33: #{tpu_custom_call.1} parent=31 // pred_check
          %p240 = pneg %p50
        $region34: #{tpu_custom_call.1} parent=31 // pred_check_branch
          %242 = sbr.rel (%p240) target = $region36
        $region35: #{tpu_custom_call.1} parent=31 // pred_region
          %s243 = sand.u32 %s40, 1
          %s244 = scalar_lea.sflag [#allocation4], %s243
          %s245 = sand.u32 %s40, 1
          %s246 = smul.addr %s245, 32
          %s247 = scalar_lea.vmem [#allocation3], %s246
          %s248 = smul.u32 4, %s25
          %s250 = ssub.s32 512, 512
          %251 = vsyncadd %s244, %s250
          %s252 = smul.addr %s248, 128
          %s253 = scalar_lea.hbm %s0, %s252
          %s254 = sshll.u32 %s247, 4
          %s255 = int_to_ptr.vmem [resolvable:$true] %s254
          %260 = dma.hbm_to_vmem [thread:$0]  %s253, 512, %s255, %s244, 128, 128, 8
        $region36: #{tpu_custom_call.1} parent=31 // pred_fallthru
          _
      $region32: #{tpu_custom_call.1} parent=5 // pred_fallthru
        _
      %p261 = scmp.le.s32.totalorder 1, %s18
      %p262 = scmp.lt.s32.totalorder %s18, 3
      %p263 = pnand %p261, %p262
      %p264 = pneg %p263
      // Predicated region
      $region37: #{tpu_custom_call.1} parent=5 // pred_check
        _
      $region38: #{tpu_custom_call.1} parent=5 // pred_check_branch
        %266 = sbr.rel (%p263) target = $region40
      $region39: #{tpu_custom_call.1} parent=5 // pred_region
        %s267 = ssub.s32 %s18, 1
        %s268 = sand.u32 %s43, 1
        %s269 = scalar_lea.sflag [#allocation4], %s268
        %s270 = sand.u32 %s43, 1
        %s271 = smul.addr %s270, 32
        %s272 = scalar_lea.vmem [#allocation3], %s271
        // Predicated region
        $region41: #{tpu_custom_call.1} parent=39 // pred_check
          %p273 = pneg %p56
        $region42: #{tpu_custom_call.1} parent=39 // pred_check_branch
          %275 = sbr.rel (%p273) target = $region44
        $region43: #{tpu_custom_call.1} parent=39 // pred_region
          %276 = dma.done %s269, 512
        $region44: #{tpu_custom_call.1} parent=39 // pred_fallthru
          _
        // Predicated region
        $region45: #{tpu_custom_call.1} parent=39 // pred_check
          %p277 = pneg %p82
        $region46: #{tpu_custom_call.1} parent=39 // pred_check_branch
          %279 = sbr.rel (%p277) target = $region48
        $region47: #{tpu_custom_call.1} parent=39 // pred_region
          %280 = dma.done [#allocation7], 2048
        $region48: #{tpu_custom_call.1} parent=39 // pred_fallthru
          _
        // Predicated region
        $region49: #{tpu_custom_call.1} parent=39 // pred_check
          %p281 = pneg %p134
        $region50: #{tpu_custom_call.1} parent=39 // pred_check_branch
          %283 = sbr.rel (%p281) target = $region52
        $region51: #{tpu_custom_call.1} parent=39 // pred_region
          %284 = dma.done [#allocation7], 2048
        $region52: #{tpu_custom_call.1} parent=39 // pred_fallthru
          _
        %s285 = sand.u32 %s43, 1
        %s286 = scalar_lea.sflag [#allocation4], %s285
        %s287 = sand.u32 %s43, 1
        %s288 = smul.addr %s287, 32
        %s289 = scalar_lea.vmem [#allocation3], %s288
        %p290 = pneg %p56
        %p291 = pneg %p53
        %p292 = pneg %p82
        %p293 = pneg %p79
        %p294 = scmp.lt.s32.totalorder %s28, 0
        %s295 = scalar_select %p294, %s28, 0
        %s296 = scalar_lea.vmem %s2, %s295
        %p297 = pneg %p108
        %p298 = pneg %p105
        %p299 = pneg %p134
        %p300 = pneg %p131
        %p301 = pneg %p155
        %p302 = pneg %p152
        %p303 = pneg %p181
        %p304 = pneg %p178
        %s305 = sand.u32 %s168, 1
        %s306 = scalar_lea.sflag [#allocation5], %s305
        %s307 = sand.u32 %s168, 1
        %s308 = smul.addr %s307, 32
        %s309 = scalar_lea.vmem [#allocation9], %s308
        %s310 = smul.u32 4, %s27
        %p311 = scmp.lt.s32.totalorder %s28, 0
        %s312 = scalar_select %p311, %s28, 0
        %s313 = scalar_lea.vmem %s2, %s312
        %s314 = smul.u32 16, %s28
        %s315 = smul.u32 4, %s27
        %p316 = scmp.eq.s32.totalorder %s28, 0
        // Predicated region
        $region53: #{tpu_custom_call.1} parent=39 // pred_check
          %p317 = pneg %p316
        $region54: #{tpu_custom_call.1} parent=39 // pred_check_branch
          %319 = sbr.rel (%p317) target = $region56
        $region55: #{tpu_custom_call.1} parent=39 // pred_region
          %320 = vst [vmem:[#allocation2] sm:$0xff] 0.0
          %321 = vst [vmem:[#allocation2 + $0x8] sm:$0xff] 0.0
          %322 = vst [vmem:[#allocation2 + $0x10] sm:$0xff] 0.0
          %323 = vst [vmem:[#allocation2 + $0x18] sm:$0xff] 0.0
        $region56: #{tpu_custom_call.1} parent=39 // pred_fallthru
          _
        %v324 = vld [vmem:[%s272] sm:$0xff]
        %v325 = vld [vmem:[%s272 + $0x8] sm:$0xff]
        %v326 = vld [vmem:[%s272 + $0x10] sm:$0xff]
        %v327 = vld [vmem:[%s272 + $0x18] sm:$0xff]
        %v328 = vld [vmem:[#allocation6] sm:$0xff]
        %v329 = vld [vmem:[#allocation6 + $0x8] sm:$0xff]
        %v330 = vld [vmem:[#allocation6 + $0x10] sm:$0xff]
        %v331 = vld [vmem:[#allocation6 + $0x18] sm:$0xff]
        %v332 = vld [vmem:[#allocation6 + $0x20] sm:$0xff]
        %v333 = vld [vmem:[#allocation6 + $0x28] sm:$0xff]
        %v334 = vld [vmem:[#allocation6 + $0x30] sm:$0xff]
        %v335 = vld [vmem:[#allocation6 + $0x38] sm:$0xff]
        %v336 = vld [vmem:[#allocation6 + $0x40] sm:$0xff]
        %v337 = vld [vmem:[#allocation6 + $0x48] sm:$0xff]
        %v338 = vld [vmem:[#allocation6 + $0x50] sm:$0xff]
        %v339 = vld [vmem:[#allocation6 + $0x58] sm:$0xff]
        %v340 = vld [vmem:[#allocation6 + $0x60] sm:$0xff]
        %v341 = vld [vmem:[#allocation6 + $0x68] sm:$0xff]
        %v342 = vld [vmem:[#allocation6 + $0x70] sm:$0xff]
        %v343 = vld [vmem:[#allocation6 + $0x78] sm:$0xff]
        %v344 = vld [vmem:[%s313] sm:$0x1]
        %v346 = vlaneseq
        %v347 = vshrl.u32 %v346, 7
        %v348 = vsub.s32 0, %v347
        %v349 = vrot.slane %v344, %v348
        %351 = vmatprep.subr.mxu0 0.0
        %352 = vmatpush1.msra.mxu0 %v343
        %353 = vmatprep.subr.mxu0 0.0
        %354 = vmatpush1.msra.mxu0 %v342
        %355 = vmatprep.subr.mxu0 0.0
        %356 = vmatpush1.msra.mxu0 %v341
        %357 = vmatprep.subr.mxu0 0.0
        %358 = vmatpush1.msra.mxu0 %v340
        %359 = vmatprep.subr.mxu0 0.0
        %360 = vmatpush1.msra.mxu0 %v339
        %361 = vmatprep.subr.mxu0 0.0
        %362 = vmatpush1.msra.mxu0 %v338
        %363 = vmatprep.subr.mxu0 0.0
        %364 = vmatpush1.msra.mxu0 %v337
        %365 = vmatprep.subr.mxu0 0.0
        %366 = vmatpush1.msra.mxu0 %v336
        %367 = vmatprep.subr.mxu0 0.0
        %368 = vmatpush1.msra.mxu0 %v335
        %369 = vmatprep.subr.mxu0 0.0
        %370 = vmatpush1.msra.mxu0 %v334
        %371 = vmatprep.subr.mxu0 0.0
        %372 = vmatpush1.msra.mxu0 %v333
        %373 = vmatprep.subr.mxu0 0.0
        %374 = vmatpush1.msra.mxu0 %v332
        %375 = vmatprep.subr.mxu0 0.0
        %376 = vmatpush1.msra.mxu0 %v331
        %377 = vmatprep.subr.mxu0 0.0
        %378 = vmatpush1.msra.mxu0 %v330
        %379 = vmatprep.subr.mxu0 0.0
        %380 = vmatpush1.msra.mxu0 %v329
        %381 = vmatprep.subr.mxu0 0.0
        %382 = vmatpush1.msra.mxu0 %v328
        %383 = vmatprep.subr.mxu0 0.0
        %384 = vmatpush2.msra.mxu0 0.0
        %385 = vmatprep.subr.mxu0 0.0
        %386 = vmatpush2.msra.mxu0 0.0
        %387 = vmatprep.subr.mxu0 0.0
        %388 = vmatpush2.msra.mxu0 0.0
        %389 = vmatprep.subr.mxu0 0.0
        %390 = vmatpush2.msra.mxu0 0.0
        %391 = vmatprep.subr.mxu0 0.0
        %392 = vmatpush2.msra.mxu0 0.0
        %393 = vmatprep.subr.mxu0 0.0
        %394 = vmatpush2.msra.mxu0 0.0
        %395 = vmatprep.subr.mxu0 0.0
        %396 = vmatpush2.msra.mxu0 0.0
        %397 = vmatprep.subr.mxu0 0.0
        %398 = vmatpush2.msra.mxu0 0.0
        %399 = vmatprep.subr.mxu0 0.0
        %400 = vmatpush2.msra.mxu0 0.0
        %401 = vmatprep.subr.mxu0 0.0
        %402 = vmatpush2.msra.mxu0 0.0
        %403 = vmatprep.subr.mxu0 0.0
        %404 = vmatpush2.msra.mxu0 0.0
        %405 = vmatprep.subr.mxu0 0.0
        %406 = vmatpush2.msra.mxu0 0.0
        %407 = vmatprep.subr.mxu0 0.0
        %408 = vmatpush2.msra.mxu0 0.0
        %409 = vmatprep.subr.mxu0 0.0
        %410 = vmatpush2.msra.mxu0 0.0
        %411 = vmatprep.subr.mxu0 0.0
        %412 = vmatpush2.msra.mxu0 0.0
        %413 = vmatprep.subr.mxu0 0.0
        %414 = vmatpush2.msra.mxu0 0.0
        %415 = vmatprep.mubr.f32.mxu0 0.0
        %416 = vmatmul.mubr.f32.gmra.mxu0 %v324
        %v417 = vpop.f32.mrf.mxu0
        %v418 = vadd.f32 %v349, %v417
        %v419 = vpop.f32.mrf.mxu0
        %420 = vmatprep.mubr.f32.mxu0 0.0
        %421 = vmatmul.mubr.f32.gmra.mxu0 %v325
        %v422 = vpop.f32.mrf.mxu0
        %v423 = vadd.f32 %v349, %v422
        %v424 = vpop.f32.mrf.mxu0
        %425 = vmatprep.mubr.f32.mxu0 0.0
        %426 = vmatmul.mubr.f32.gmra.mxu0 %v326
        %v427 = vpop.f32.mrf.mxu0
        %v428 = vadd.f32 %v349, %v427
        %v429 = vpop.f32.mrf.mxu0
        %430 = vmatprep.mubr.f32.mxu0 0.0
        %431 = vmatmul.mubr.f32.gmra.mxu0 %v327
        %v432 = vpop.f32.mrf.mxu0
        %v433 = vadd.f32 %v349, %v432
        %v434 = vpop.f32.mrf.mxu0
        %435 = vdwg.mxu0
        %v436 = vmax.f32 %v418, 0.0
        %v437 = vmax.f32 %v423, 0.0
        %v438 = vmax.f32 %v428, 0.0
        %v439 = vmax.f32 %v433, 0.0
        %v440 = vld [vmem:[#allocation2] sm:$0xff]
        %v441 = vld [vmem:[#allocation2 + $0x8] sm:$0xff]
        %v442 = vld [vmem:[#allocation2 + $0x10] sm:$0xff]
        %v443 = vld [vmem:[#allocation2 + $0x18] sm:$0xff]
        %v444 = vld [vmem:[#allocation8] sm:$0xff]
        %v445 = vld [vmem:[#allocation8 + $0x8] sm:$0xff]
        %v446 = vld [vmem:[#allocation8 + $0x10] sm:$0xff]
        %v447 = vld [vmem:[#allocation8 + $0x18] sm:$0xff]
        %v448 = vld [vmem:[#allocation8 + $0x20] sm:$0xff]
        %v449 = vld [vmem:[#allocation8 + $0x28] sm:$0xff]
        %v450 = vld [vmem:[#allocation8 + $0x30] sm:$0xff]
        %v451 = vld [vmem:[#allocation8 + $0x38] sm:$0xff]
        %v452 = vld [vmem:[#allocation8 + $0x40] sm:$0xff]
        %v453 = vld [vmem:[#allocation8 + $0x48] sm:$0xff]
        %v454 = vld [vmem:[#allocation8 + $0x50] sm:$0xff]
        %v455 = vld [vmem:[#allocation8 + $0x58] sm:$0xff]
        %v456 = vld [vmem:[#allocation8 + $0x60] sm:$0xff]
        %v457 = vld [vmem:[#allocation8 + $0x68] sm:$0xff]
        %v458 = vld [vmem:[#allocation8 + $0x70] sm:$0xff]
        %v459 = vld [vmem:[#allocation8 + $0x78] sm:$0xff]
        %460 = vmatprep.subr.mxu0 0.0
        %461 = vmatpush1.msra.mxu0 %v459
        %462 = vmatprep.subr.mxu0 0.0
        %463 = vmatpush1.msra.mxu0 %v458
        %464 = vmatprep.subr.mxu0 0.0
        %465 = vmatpush1.msra.mxu0 %v457
        %466 = vmatprep.subr.mxu0 0.0
        %467 = vmatpush1.msra.mxu0 %v456
        %468 = vmatprep.subr.mxu0 0.0
        %469 = vmatpush1.msra.mxu0 %v455
        %470 = vmatprep.subr.mxu0 0.0
        %471 = vmatpush1.msra.mxu0 %v454
        %472 = vmatprep.subr.mxu0 0.0
        %473 = vmatpush1.msra.mxu0 %v453
        %474 = vmatprep.subr.mxu0 0.0
        %475 = vmatpush1.msra.mxu0 %v452
        %476 = vmatprep.subr.mxu0 0.0
        %477 = vmatpush1.msra.mxu0 %v451
        %478 = vmatprep.subr.mxu0 0.0
        %479 = vmatpush1.msra.mxu0 %v450
        %480 = vmatprep.subr.mxu0 0.0
        %481 = vmatpush1.msra.mxu0 %v449
        %482 = vmatprep.subr.mxu0 0.0
        %483 = vmatpush1.msra.mxu0 %v448
        %484 = vmatprep.subr.mxu0 0.0
        %485 = vmatpush1.msra.mxu0 %v447
        %486 = vmatprep.subr.mxu0 0.0
        %487 = vmatpush1.msra.mxu0 %v446
        %488 = vmatprep.subr.mxu0 0.0
        %489 = vmatpush1.msra.mxu0 %v445
        %490 = vmatprep.subr.mxu0 0.0
        %491 = vmatpush1.msra.mxu0 %v444
        %492 = vmatprep.subr.mxu0 0.0
        %493 = vmatpush2.msra.mxu0 0.0
        %494 = vmatprep.subr.mxu0 0.0
        %495 = vmatpush2.msra.mxu0 0.0
        %496 = vmatprep.subr.mxu0 0.0
        %497 = vmatpush2.msra.mxu0 0.0
        %498 = vmatprep.subr.mxu0 0.0
        %499 = vmatpush2.msra.mxu0 0.0
        %500 = vmatprep.subr.mxu0 0.0
        %501 = vmatpush2.msra.mxu0 0.0
        %502 = vmatprep.subr.mxu0 0.0
        %503 = vmatpush2.msra.mxu0 0.0
        %504 = vmatprep.subr.mxu0 0.0
        %505 = vmatpush2.msra.mxu0 0.0
        %506 = vmatprep.subr.mxu0 0.0
        %507 = vmatpush2.msra.mxu0 0.0
        %508 = vmatprep.subr.mxu0 0.0
        %509 = vmatpush2.msra.mxu0 0.0
        %510 = vmatprep.subr.mxu0 0.0
        %511 = vmatpush2.msra.mxu0 0.0
        %512 = vmatprep.subr.mxu0 0.0
        %513 = vmatpush2.msra.mxu0 0.0
        %514 = vmatprep.subr.mxu0 0.0
        %515 = vmatpush2.msra.mxu0 0.0
        %516 = vmatprep.subr.mxu0 0.0
        %517 = vmatpush2.msra.mxu0 0.0
        %518 = vmatprep.subr.mxu0 0.0
        %519 = vmatpush2.msra.mxu0 0.0
        %520 = vmatprep.subr.mxu0 0.0
        %521 = vmatpush2.msra.mxu0 0.0
        %522 = vmatprep.subr.mxu0 0.0
        %523 = vmatpush2.msra.mxu0 0.0
        %524 = vmatprep.mubr.f32.mxu0 0.0
        %525 = vmatmul.mubr.f32.gmra.mxu0 %v436
        %v526 = vpop.f32.mrf.mxu0
        %v527 = vadd.f32 0.0, %v526
        %v528 = vpop.f32.mrf.mxu0
        %529 = vmatprep.mubr.f32.mxu0 0.0
        %530 = vmatmul.mubr.f32.gmra.mxu0 %v437
        %v531 = vpop.f32.mrf.mxu0
        %v532 = vadd.f32 0.0, %v531
        %v533 = vpop.f32.mrf.mxu0
        %534 = vmatprep.mubr.f32.mxu0 0.0
        %535 = vmatmul.mubr.f32.gmra.mxu0 %v438
        %v536 = vpop.f32.mrf.mxu0
        %v537 = vadd.f32 0.0, %v536
        %v538 = vpop.f32.mrf.mxu0
        %539 = vmatprep.mubr.f32.mxu0 0.0
        %540 = vmatmul.mubr.f32.gmra.mxu0 %v439
        %v541 = vpop.f32.mrf.mxu0
        %v542 = vadd.f32 0.0, %v541
        %v543 = vpop.f32.mrf.mxu0
        %544 = vdwg.mxu0
        %v545 = vadd.f32 %v440, %v527
        %v546 = vadd.f32 %v441, %v532
        %v547 = vadd.f32 %v442, %v537
        %v548 = vadd.f32 %v443, %v542
        %549 = vst [vmem:[#allocation2] sm:$0xff] %v545
        %550 = vst [vmem:[#allocation2 + $0x8] sm:$0xff] %v546
        %551 = vst [vmem:[#allocation2 + $0x10] sm:$0xff] %v547
        %552 = vst [vmem:[#allocation2 + $0x18] sm:$0xff] %v548
        // Predicated region
        $region57: #{tpu_custom_call.1} parent=39 // pred_check
          %p553 = pneg %p316
        $region58: #{tpu_custom_call.1} parent=39 // pred_check_branch
          %555 = sbr.rel (%p553) target = $region60
        $region59: #{tpu_custom_call.1} parent=39 // pred_region
          %v556 = vld [vmem:[#allocation2] sm:$0xff]
          %v557 = vld [vmem:[#allocation2 + $0x8] sm:$0xff]
          %v558 = vld [vmem:[#allocation2 + $0x10] sm:$0xff]
          %v559 = vld [vmem:[#allocation2 + $0x18] sm:$0xff]
          %v560 = vld [vmem:[%s4] sm:$0x1]
          %v562 = vlaneseq
          %v563 = vshrl.u32 %v562, 7
          %v564 = vsub.s32 0, %v563
          %v565 = vrot.slane %v560, %v564
          %v567 = vadd.f32 %v556, %v565
          %v568 = vadd.f32 %v557, %v565
          %v569 = vadd.f32 %v558, %v565
          %v570 = vadd.f32 %v559, %v565
          %571 = vst [vmem:[%s309] sm:$0xff] %v567
          %572 = vst [vmem:[%s309 + $0x8] sm:$0xff] %v568
          %573 = vst [vmem:[%s309 + $0x10] sm:$0xff] %v569
          %574 = vst [vmem:[%s309 + $0x18] sm:$0xff] %v570
        $region60: #{tpu_custom_call.1} parent=39 // pred_fallthru
          _
        %s575 = sand.u32 %s168, 1
        %s576 = scalar_lea.sflag [#allocation5], %s575
        %s577 = sand.u32 %s168, 1
        %s578 = smul.addr %s577, 32
        %s579 = scalar_lea.vmem [#allocation9], %s578
        // Predicated region
        $region61: #{tpu_custom_call.1} parent=39 // pred_check
          %p580 = pneg %p178
        $region62: #{tpu_custom_call.1} parent=39 // pred_check_branch
          %582 = sbr.rel (%p580) target = $region64
        $region63: #{tpu_custom_call.1} parent=39 // pred_region
          %s583 = smul.u32 4, %s27
          %s585 = ssub.s32 512, 512
          %586 = vsyncadd %s576, %s585
          %s587 = smul.addr %s583, 128
          %s588 = scalar_lea.hbm %s5, %s587
          %s589 = sshll.u32 %s579, 4
          %s590 = int_to_ptr.vmem [resolvable:$true] %s589
          %595 = dma.vmem_to_hbm [thread:$0]  %s590, 512, %s588, %s576, 128, 128, 8
        $region64: #{tpu_custom_call.1} parent=39 // pred_fallthru
          _
      $region40: #{tpu_custom_call.1} parent=5 // pred_fallthru
        _
      %p596 = scmp.le.s32.totalorder 2, %s18
      // Predicated region
      $region65: #{tpu_custom_call.1} parent=5 // pred_check
        %p597 = pneg %p596
      $region66: #{tpu_custom_call.1} parent=5 // pred_check_branch
        %599 = sbr.rel (%p597) target = $region68
      $region67: #{tpu_custom_call.1} parent=5 // pred_region
        %s600 = ssub.s32 %s18, 2
        // Predicated region
        $region69: #{tpu_custom_call.1} parent=67 // pred_check
          %p601 = pneg %p184
        $region70: #{tpu_custom_call.1} parent=67 // pred_check_branch
          %603 = sbr.rel (%p601) target = $region72
        $region71: #{tpu_custom_call.1} parent=67 // pred_region
          %s604 = sand.u32 %s169, 1
          %s605 = scalar_lea.sflag [#allocation5], %s604
          %s606 = sand.u32 %s169, 1
          %s607 = smul.addr %s606, 32
          %s608 = scalar_lea.vmem [#allocation9], %s607
          %609 = dma.done %s605, 512
        $region72: #{tpu_custom_call.1} parent=67 // pred_fallthru
          _
      $region68: #{tpu_custom_call.1} parent=5 // pred_fallthru
        _
    $region6: #{tpu_custom_call.1} parent=1 // loop_footer
      %s22 = sadd.s32 1, %s18
    $region7: #{tpu_custom_call.1} parent=1 // loop_footer_branch
      %17 = sbr.rel target = $region3
    $region8: #{tpu_custom_call.1} parent=1 // loop_exit
      _
    %610 = vsyncpa [#allocation4], 1
    %s611 = scalar_lea.sflag [#allocation4], 1
    %612 = vsyncpa %s611, 1
    %613 = vsyncpa [#allocation7], 1
    %614 = vsyncpa [#allocation5], 1
    %s615 = scalar_lea.sflag [#allocation5], 1
    %616 = vsyncpa %s615, 1

</llo_original>
